<compile_context>
chip_gen: v7x
topology: tpu7x:2x2x1
jax: 0.10.0
libtpu: 0.0.40
codegen_flags: <defaults>
</compile_context>

<pallas_src>
import math

import jax
import jax.numpy as jnp
from jax.experimental import pallas as pl
from jax.experimental.pallas import tpu as pltpu


def _round_up(x, m):
    return ((x + m - 1) // m) * m


def _linear_kernel(x_ref, w_ref, b_ref, o_ref, acc_ref):
    # x_ref: (tm, tk), w_ref: (tk, tn), b_ref: (1, tn), o_ref: (tm, tn)
    k = pl.program_id(2)

    @pl.when(k == 0)
    def _init():
        acc_ref[...] = jnp.zeros_like(acc_ref)

    acc_ref[...] += jnp.dot(
        x_ref[...], w_ref[...], preferred_element_type=jnp.float32
    )

    @pl.when(k == pl.num_programs(2) - 1)
    def _finalize():
        # Bias is added exactly once, in the epilogue (broadcast (1,tn)->(tm,tn)).
        o_ref[...] = (acc_ref[...] + b_ref[...].astype(jnp.float32)).astype(
            o_ref.dtype
        )


def linear_forward(x, w_eff, bias, *, tm=None, tn=None, tk=None):
    """y = x @ w_eff + bias.

    x:     [M, K]
    w_eff: [K, N]   (== torch effective_W(), i.e. nn.Linear weight transposed,
                     but stored in this layout so no transpose runs per call)
    bias:  [1, N]   (zeros if the module was built with bias=False)
    """
    M, K = x.shape
    K2, N = w_eff.shape
    assert K == K2
    assert bias.shape == (1, N)

    # MXU / lane aligned tile sizes, adapted to the problem size.
    # tm: sublane axis -> multiple of 8; tk, tn: lane axes -> multiples of 128.
    if tm is None:
        tm = min(256, _round_up(M, 8))
    if tk is None:
        tk = min(512, _round_up(K, 128))
    if tn is None:
        tn = min(256, _round_up(N, 128))

    M_pad = _round_up(M, tm)
    K_pad = _round_up(K, tk)
    N_pad = _round_up(N, tn)

    # Pad in the wrapper so every block satisfies the (8,128) rule and the
    # output store is lane-dense. Zero padding along K contributes nothing.
    if (M_pad, K_pad) != (M, K):
        x = jnp.pad(x, ((0, M_pad - M), (0, K_pad - K)))
    if (K_pad, N_pad) != (K, N):
        w_eff = jnp.pad(w_eff, ((0, K_pad - K), (0, N_pad - N)))
    if N_pad != N:
        bias = jnp.pad(bias, ((0, 0), (0, N_pad - N)))

    grid = (M_pad // tm, N_pad // tn, K_pad // tk)

    itemsize = jnp.dtype(x.dtype).itemsize
    cost = pl.CostEstimate(
        flops=2 * M_pad * N_pad * K_pad,
        transcendentals=0,
        bytes_accessed=(M_pad * K_pad + K_pad * N_pad + N_pad + M_pad * N_pad)
        * itemsize,
    )

    # VMEM budget: double-buffered x/w/bias/out tiles + f32 accumulator,
    # with 2x headroom, clamped to a range that is safe on all generations
    # (v7x has only 64 MiB physical VMEM per TC).
    tile_bytes = (
        2 * (tm * tk + tk * tn + tn + tm * tn) * itemsize + tm * tn * 4
    )
    vmem_limit = int(min(max(2 * tile_bytes, 32 * 1024 * 1024), 48 * 1024 * 1024))

    out = pl.pallas_call(
        _linear_kernel,
        out_shape=jax.ShapeDtypeStruct((M_pad, N_pad), x.dtype),
        grid=grid,
        in_specs=[
            pl.BlockSpec((tm, tk), lambda i, j, k: (i, k)),
            pl.BlockSpec((tk, tn), lambda i, j, k: (k, j)),
            pl.BlockSpec((1, tn), lambda i, j, k: (0, j)),
        ],
        out_specs=pl.BlockSpec((tm, tn), lambda i, j, k: (i, j)),
        scratch_shapes=[pltpu.VMEM((tm, tn), jnp.float32)],
        compiler_params=pltpu.CompilerParams(
            dimension_semantics=("parallel", "parallel", "arbitrary"),
            vmem_limit_bytes=vmem_limit,
        ),
        cost_estimate=cost,
    )(x, w_eff, bias)

    if (M_pad, N_pad) != (M, N):
        out = out[:M, :N]
    return out


def init_linear_params(key, insize, outsize, bias=True, dtype=jnp.float32):
    """Deterministic init mimicking torch.nn.Linear's default init.

    The weight is stored directly in effective_W layout [insize, outsize]
    (statistically identical to kaiming_uniform on [outsize, insize] then
    transposing), so no transpose is materialized on the forward path.
    """
    kw, kb = jax.random.split(key)
    bound = 1.0 / math.sqrt(insize)  # kaiming_uniform_(a=sqrt(5)) -> 1/sqrt(fan_in)
    w_eff = jax.random.uniform(kw, (insize, outsize), dtype, -bound, bound)
    if bias:
        b = jax.random.uniform(kb, (1, outsize), dtype, -bound, bound)
    else:
        b = jnp.zeros((1, outsize), dtype)  # nn.Linear(bias=False) adds nothing
    return w_eff, b
    # TODO(synk): eig() / reg_error() of LinearBase are host-side linalg
    # utilities, not part of the forward pass; not implemented as kernels.


if __name__ == "__main__":
    key = jax.random.PRNGKey(0)

    # Small shapes consistent with the module: [batch, in_features].
    batch, insize, outsize = 8, 32, 64
    k_x, k_p = jax.random.split(key)
    x = jax.random.normal(k_x, (batch, insize), jnp.float32)
    w_eff, bias = init_linear_params(k_p, insize, outsize, bias=True)

    y = jax.block_until_ready(linear_forward(x, w_eff, bias))
    y_ref = x @ w_eff + bias
    assert y.shape == (batch, outsize)
    assert jnp.allclose(y, y_ref, atol=1e-5, rtol=1e-5)

    # Second check: non-aligned shapes exercising padding + multi-tile grid.
    k_x2, k_p2 = jax.random.split(k_p)
    M2, K2, N2 = 300, 384, 200
    x2 = jax.random.normal(k_x2, (M2, K2), jnp.float32)
    w2, b2 = init_linear_params(k_p2, K2, N2, bias=False)
    y2 = jax.block_until_ready(linear_forward(x2, w2, b2))
    y2_ref = x2 @ w2 + b2
    assert y2.shape == (M2, N2)
    assert jnp.allclose(y2, y2_ref, atol=1e-4, rtol=1e-4)

    print("KERNEL_OK")
</pallas_src>

<mosaic_0001>
module attributes {stable_mosaic.version = 11 : i64} {
  func.func @_linear_kernel(%arg0: i32, %arg1: i32, %arg2: i32, %arg3: memref<8x128xf32, #tpu.memory_space<vmem>>, %arg4: memref<128x128xf32, #tpu.memory_space<vmem>>, %arg5: memref<1x128xf32, #tpu.memory_space<vmem>>, %arg6: memref<8x128xf32, #tpu.memory_space<vmem>>, %arg7: memref<8x128xf32, #tpu.memory_space<vmem>>) attributes {dimension_semantics = [#tpu.dimension_semantics<parallel>, #tpu.dimension_semantics<parallel>, #tpu.dimension_semantics<arbitrary>], iteration_bounds = array<i64: 1, 1, 1>, scalar_prefetch = 0 : i64, scratch_operands = 1 : i64, tpu.core_type = #tpu.core_type<tc>, window_params = [{transform_indices = @transform_0, window_bounds = array<i64: 8, 128>}, {transform_indices = @transform_1, window_bounds = array<i64: 128, 128>}, {transform_indices = @transform_2, window_bounds = array<i64: 1, 128>}, {transform_indices = @transform_3, window_bounds = array<i64: 8, 128>}]} {
    %c0_i32 = arith.constant 0 : i32
    %0 = arith.cmpi eq, %arg2, %c0_i32 : i32
    %1 = arith.extui %0 : i1 to i32
    %c0_i32_0 = arith.constant 0 : i32
    %2 = arith.cmpi ne, %1, %c0_i32_0 : i32
    scf.if %2 {
      %cst_10 = arith.constant 0.000000e+00 : f32
      %12 = vector.broadcast %cst_10 : f32 to vector<8x128xf32>
      %c0_11 = arith.constant 0 : index
      %c0_12 = arith.constant 0 : index
      %13 = vector.load %arg7[%c0_11, %c0_12] : memref<8x128xf32, #tpu.memory_space<vmem>>, vector<8x128xf32>
      tpu.vector_store %arg7[%c0_11, %c0_12], %12 {strides = array<i32>} : memref<8x128xf32, #tpu.memory_space<vmem>>, vector<8x128xf32>,
    } else {
    }
    %c0 = arith.constant 0 : index
    %c0_1 = arith.constant 0 : index
    %3 = vector.load %arg7[%c0, %c0_1] : memref<8x128xf32, #tpu.memory_space<vmem>>, vector<8x128xf32>
    %c0_2 = arith.constant 0 : index
    %c0_3 = arith.constant 0 : index
    %4 = vector.load %arg3[%c0_2, %c0_3] : memref<8x128xf32, #tpu.memory_space<vmem>>, vector<8x128xf32>
    %c0_4 = arith.constant 0 : index
    %c0_5 = arith.constant 0 : index
    %5 = vector.load %arg4[%c0_4, %c0_5] : memref<128x128xf32, #tpu.memory_space<vmem>>, vector<128x128xf32>
    %cst = arith.constant dense<0.000000e+00> : vector<8x128xf32>
    %6 = tpu.matmul %4, %5, %cst {dimension_numbers = #tpu.dot_dimension_numbers<[1], [0], [0], [1], [0, 0, 1, 1], [], []>} : vector<8x128xf32>, vector<128x128xf32>, vector<8x128xf32> -> vector<8x128xf32>
    %7 = arith.addf %3, %6 : vector<8x128xf32>
    %c0_6 = arith.constant 0 : index
    %c0_7 = arith.constant 0 : index
    %8 = vector.load %arg7[%c0_6, %c0_7] : memref<8x128xf32, #tpu.memory_space<vmem>>, vector<8x128xf32>
    tpu.vector_store %arg7[%c0_6, %c0_7], %7 {strides = array<i32>} : memref<8x128xf32, #tpu.memory_space<vmem>>, vector<8x128xf32>,
    %c0_i32_8 = arith.constant 0 : i32
    %9 = arith.cmpi eq, %arg2, %c0_i32_8 : i32
    %10 = arith.extui %9 : i1 to i32
    %c0_i32_9 = arith.constant 0 : i32
    %11 = arith.cmpi ne, %10, %c0_i32_9 : i32
    scf.if %11 {
      %c0_10 = arith.constant 0 : index
      %c0_11 = arith.constant 0 : index
      %12 = vector.load %arg7[%c0_10, %c0_11] : memref<8x128xf32, #tpu.memory_space<vmem>>, vector<8x128xf32>
      %c0_12 = arith.constant 0 : index
      %c0_13 = arith.constant 0 : index
      %13 = vector.load %arg5[%c0_12, %c0_13] : memref<1x128xf32, #tpu.memory_space<vmem>>, vector<1x128xf32>
      %14 = vector.broadcast %13 : vector<1x128xf32> to vector<8x128xf32>
      %15 = arith.addf %12, %14 : vector<8x128xf32>
      %c0_14 = arith.constant 0 : index
      %c0_15 = arith.constant 0 : index
      %16 = vector.load %arg6[%c0_14, %c0_15] : memref<8x128xf32, #tpu.memory_space<vmem>>, vector<8x128xf32>
      tpu.vector_store %arg6[%c0_14, %c0_15], %15 {strides = array<i32>} : memref<8x128xf32, #tpu.memory_space<vmem>>, vector<8x128xf32>,
    } else {
    }
    return
  }
  func.func @transform_0(%arg0: i32, %arg1: i32, %arg2: i32) -> (i32, i32) {
    %c0_i32 = arith.constant 0 : i32
    return %arg0, %arg2 : i32, i32
  }
  func.func @transform_1(%arg0: i32, %arg1: i32, %arg2: i32) -> (i32, i32) {
    %c0_i32 = arith.constant 0 : i32
    return %arg2, %arg1 : i32, i32
  }
  func.func @transform_2(%arg0: i32, %arg1: i32, %arg2: i32) -> (i32, i32) {
    %c0_i32 = arith.constant 0 : i32
    %c0_i32_0 = arith.constant 0 : i32
    return %c0_i32, %arg1 : i32, i32
  }
  func.func @transform_3(%arg0: i32, %arg1: i32, %arg2: i32) -> (i32, i32) {
    %c0_i32 = arith.constant 0 : i32
    return %arg0, %arg1 : i32, i32
  }
}

</mosaic_0001>

<llo_original>
// kernel: tpu_custom_call.1
$region0: #{tpu_custom_call.1}
  #allocation0 [shape = 'u32[]', space=smem, size = 0x4, offset = 0x4, fixed_abs, tag = 'smem constant byte address 0x4 - core index']
  #allocation1 [shape = 'u32[144,128]{1,0:T(1,128)}', space=vmem, size = 0x12000, scoped, tag = 'internal scratch']
  #allocation2 [shape = 'f32[8,128]{1,0:T(8,128)}', space=vmem, size = 0x1000, scoped, tag = 'scratch operand']
  %s0 = inlined_call_operand.hbm [shape: f32[8,128], index: 0, kind: input, shape index: {}]
  %s1 = inlined_call_operand.hbm [shape: f32[128,128], index: 1, kind: input, shape index: {}]
  %s2 = inlined_call_operand.vmem [shape: f32[1,128], index: 2, kind: input, shape index: {}]
  %s3 = inlined_call_operand.hbm [shape: f32[8,128], index: 3, kind: output, shape index: {}]
  %s4 = sld [smem:[#allocation0]]
  $region38: #{tpu_custom_call.1} parent=0
    _
  %s6 = ssub.s32 1, %s4
  %s7 = scalar_select 0, %s6, %s4
  $region1: #{tpu_custom_call.1} parent=0
    #allocation3 [shape = 'u8[4096]{0}', space=vmem, size = 0x1000, scoped, tag = 'input window, operand 0, single buffered']
    #allocation4 [shape = 's32[1]{0}', space=sflag, size = 0x4, scoped, tag = 'scoped memory for tpu_custom_call.1']
    #allocation5 [shape = 's32[1]{0}', space=sflag, size = 0x4, scoped, tag = 'scoped memory for tpu_custom_call.1']
    #allocation6 [shape = 'u8[65536]{0}', space=vmem, size = 0x10000, scoped, tag = 'input window, operand 1, single buffered']
    #allocation7 [shape = 's32[1]{0}', space=sflag, size = 0x4, scoped, tag = 'scoped memory for tpu_custom_call.1']
    #allocation8 [shape = 'u8[4096]{0}', space=vmem, size = 0x1000, scoped, tag = 'output window, operand 0, single buffered']
    %8 = vsyncpa [#allocation4], 0
    %9 = vsyncpa [#allocation7], 0
    %10 = vsyncpa [#allocation5], 0
    // Predicated region
    $region2: #{tpu_custom_call.1} parent=1 // pred_check
      _
    $region3: #{tpu_custom_call.1} parent=1 // pred_check_branch
      %12 = sbr.rel (0) target = $region5
    $region4: #{tpu_custom_call.1} parent=1 // pred_region
      %s14 = ssub.s32 128, 128
      %15 = vsyncadd [#allocation4], %s14
      %s17 = sshll.u32 [#allocation3], 4
      %s18 = int_to_ptr.vmem [resolvable:$true] %s17
      %20 = dma.hbm_to_vmem [thread:$0]  %s0, 128, %s18, [#allocation4]
    $region5: #{tpu_custom_call.1} parent=1 // pred_fallthru
      _
    // Predicated region
    $region6: #{tpu_custom_call.1} parent=1 // pred_check
      _
    $region7: #{tpu_custom_call.1} parent=1 // pred_check_branch
      %22 = sbr.rel (0) target = $region9
    $region8: #{tpu_custom_call.1} parent=1 // pred_region
      %s24 = ssub.s32 2048, 2048
      %25 = vsyncadd [#allocation7], %s24
      %s26 = sshll.u32 [#allocation6], 4
      %s27 = int_to_ptr.vmem [resolvable:$true] %s26
      %32 = dma.hbm_to_vmem [thread:$0]  %s1, 2048, %s27, [#allocation7], 128, 128, 8
    $region9: #{tpu_custom_call.1} parent=1 // pred_fallthru
      _
    // Predicated region
    $region10: #{tpu_custom_call.1} parent=1 // pred_check
      _
    $region11: #{tpu_custom_call.1} parent=1 // pred_check_branch
      %34 = sbr.rel (0) target = $region13
    $region12: #{tpu_custom_call.1} parent=1 // pred_region
      _
    $region13: #{tpu_custom_call.1} parent=1 // pred_fallthru
      _
    // Predicated region
    $region14: #{tpu_custom_call.1} parent=1 // pred_check
      _
    $region15: #{tpu_custom_call.1} parent=1 // pred_check_branch
      %36 = sbr.rel (0) target = $region17
    $region16: #{tpu_custom_call.1} parent=1 // pred_region
      %37 = dma.done [#allocation4], 128
    $region17: #{tpu_custom_call.1} parent=1 // pred_fallthru
      _
    // Predicated region
    $region18: #{tpu_custom_call.1} parent=1 // pred_check
      _
    $region19: #{tpu_custom_call.1} parent=1 // pred_check_branch
      %39 = sbr.rel (0) target = $region21
    $region20: #{tpu_custom_call.1} parent=1 // pred_region
      %40 = dma.done [#allocation7], 2048
    $region21: #{tpu_custom_call.1} parent=1 // pred_fallthru
      _
    %p41 = scmp.eq.s32.totalorder 0, 0
    // Predicated region
    $region22: #{tpu_custom_call.1} parent=1 // pred_check
      %p42 = pneg %p41
    $region23: #{tpu_custom_call.1} parent=1 // pred_check_branch
      %44 = sbr.rel (%p42) target = $region25
    $region24: #{tpu_custom_call.1} parent=1 // pred_region
      %45 = vst [vmem:[#allocation2] sm:$0xff] 0.0
    $region25: #{tpu_custom_call.1} parent=1 // pred_fallthru
      _
    %v46 = vld [vmem:[#allocation2] sm:$0xff]
    %v47 = vld [vmem:[#allocation3] sm:$0xff]
    %v48 = vld [vmem:[#allocation6] sm:$0xff]
    %v49 = vld [vmem:[#allocation6 + $0x8] sm:$0xff]
    %v50 = vld [vmem:[#allocation6 + $0x10] sm:$0xff]
    %v51 = vld [vmem:[#allocation6 + $0x18] sm:$0xff]
    %v52 = vld [vmem:[#allocation6 + $0x20] sm:$0xff]
    %v53 = vld [vmem:[#allocation6 + $0x28] sm:$0xff]
    %v54 = vld [vmem:[#allocation6 + $0x30] sm:$0xff]
    %v55 = vld [vmem:[#allocation6 + $0x38] sm:$0xff]
    %v56 = vld [vmem:[#allocation6 + $0x40] sm:$0xff]
    %v57 = vld [vmem:[#allocation6 + $0x48] sm:$0xff]
    %v58 = vld [vmem:[#allocation6 + $0x50] sm:$0xff]
    %v59 = vld [vmem:[#allocation6 + $0x58] sm:$0xff]
    %v60 = vld [vmem:[#allocation6 + $0x60] sm:$0xff]
    %v61 = vld [vmem:[#allocation6 + $0x68] sm:$0xff]
    %v62 = vld [vmem:[#allocation6 + $0x70] sm:$0xff]
    %v63 = vld [vmem:[#allocation6 + $0x78] sm:$0xff]
    %64 = vmatprep.subr.mxu0 0.0
    %65 = vmatpush1.msra.mxu0 %v48
    %66 = vmatprep.subr.mxu0 0.0
    %67 = vmatpush1.msra.mxu0 %v49
    %68 = vmatprep.subr.mxu0 0.0
    %69 = vmatpush1.msra.mxu0 %v50
    %70 = vmatprep.subr.mxu0 0.0
    %71 = vmatpush1.msra.mxu0 %v51
    %72 = vmatprep.subr.mxu0 0.0
    %73 = vmatpush1.msra.mxu0 %v52
    %74 = vmatprep.subr.mxu0 0.0
    %75 = vmatpush1.msra.mxu0 %v53
    %76 = vmatprep.subr.mxu0 0.0
    %77 = vmatpush1.msra.mxu0 %v54
    %78 = vmatprep.subr.mxu0 0.0
    %79 = vmatpush1.msra.mxu0 %v55
    %80 = vmatprep.subr.mxu0 0.0
    %81 = vmatpush1.msra.mxu0 %v56
    %82 = vmatprep.subr.mxu0 0.0
    %83 = vmatpush1.msra.mxu0 %v57
    %84 = vmatprep.subr.mxu0 0.0
    %85 = vmatpush1.msra.mxu0 %v58
    %86 = vmatprep.subr.mxu0 0.0
    %87 = vmatpush1.msra.mxu0 %v59
    %88 = vmatprep.subr.mxu0 0.0
    %89 = vmatpush1.msra.mxu0 %v60
    %90 = vmatprep.subr.mxu0 0.0
    %91 = vmatpush1.msra.mxu0 %v61
    %92 = vmatprep.subr.mxu0 0.0
    %93 = vmatpush1.msra.mxu0 %v62
    %94 = vmatprep.subr.mxu0 0.0
    %95 = vmatpush1.msra.mxu0 %v63
    %96 = vmatprep.subr.mxu0 0.0
    %97 = vmatpush1.msra.mxu0 0.0
    %98 = vmatprep.subr.mxu0 0.0
    %99 = vmatpush1.msra.mxu0 0.0
    %100 = vmatprep.subr.mxu0 0.0
    %101 = vmatpush1.msra.mxu0 0.0
    %102 = vmatprep.subr.mxu0 0.0
    %103 = vmatpush1.msra.mxu0 0.0
    %104 = vmatprep.subr.mxu0 0.0
    %105 = vmatpush1.msra.mxu0 0.0
    %106 = vmatprep.subr.mxu0 0.0
    %107 = vmatpush1.msra.mxu0 0.0
    %108 = vmatprep.subr.mxu0 0.0
    %109 = vmatpush1.msra.mxu0 0.0
    %110 = vmatprep.subr.mxu0 0.0
    %111 = vmatpush1.msra.mxu0 0.0
    %112 = vmatprep.subr.mxu0 0.0
    %113 = vmatpush1.msra.mxu0 0.0
    %114 = vmatprep.subr.mxu0 0.0
    %115 = vmatpush1.msra.mxu0 0.0
    %116 = vmatprep.subr.mxu0 0.0
    %117 = vmatpush1.msra.mxu0 0.0
    %118 = vmatprep.subr.mxu0 0.0
    %119 = vmatpush1.msra.mxu0 0.0
    %120 = vmatprep.subr.mxu0 0.0
    %121 = vmatpush1.msra.mxu0 0.0
    %122 = vmatprep.subr.mxu0 0.0
    %123 = vmatpush1.msra.mxu0 0.0
    %124 = vmatprep.subr.mxu0 0.0
    %125 = vmatpush1.msra.mxu0 0.0
    %126 = vmatprep.subr.mxu0 0.0
    %127 = vmatpush1.msra.mxu0 0.0
    %128 = vmatprep.mubr.f32.mxu0 0.0
    %129 = vmatmul.mubr.f32.gmra.mrb[0].mxu0 %v47
    %v130 = vpop.f32.mrb[0].mxu0
    %v131 = vadd.f32 0.0, %v130
    %v132 = vpop.f32.mrb[0].mxu0
    %133 = vdwg.mxu0
    %v134 = vadd.f32 %v46, %v131
    %135 = vst [vmem:[#allocation2] sm:$0xff] %v134
    // Predicated region
    $region26: #{tpu_custom_call.1} parent=1 // pred_check
      %p136 = pneg %p41
    $region27: #{tpu_custom_call.1} parent=1 // pred_check_branch
      %138 = sbr.rel (%p136) target = $region29
    $region28: #{tpu_custom_call.1} parent=1 // pred_region
      %v139 = vld [vmem:[#allocation2] sm:$0xff]
      %v140 = vld [vmem:[%s2] sm:$0x1]
      %v142 = vlaneseq
      %v143 = vshrl.u32 %v142, 7
      %v144 = vsub.s32 0, %v143
      %v145 = vrot.slane %v140, %v144
      %v147 = vadd.f32 %v139, %v145
      %148 = vst [vmem:[#allocation8] sm:$0xff] %v147
    $region29: #{tpu_custom_call.1} parent=1 // pred_fallthru
      _
    // Predicated region
    $region30: #{tpu_custom_call.1} parent=1 // pred_check
      _
    $region31: #{tpu_custom_call.1} parent=1 // pred_check_branch
      %150 = sbr.rel (0) target = $region33
    $region32: #{tpu_custom_call.1} parent=1 // pred_region
      %s152 = ssub.s32 128, 128
      %153 = vsyncadd [#allocation5], %s152
      %s155 = sshll.u32 [#allocation8], 4
      %s156 = int_to_ptr.vmem [resolvable:$true] %s155
      %158 = dma.vmem_to_hbm [thread:$0]  %s156, 128, %s3, [#allocation5]
    $region33: #{tpu_custom_call.1} parent=1 // pred_fallthru
      _
    // Predicated region
    $region34: #{tpu_custom_call.1} parent=1 // pred_check
      _
    $region35: #{tpu_custom_call.1} parent=1 // pred_check_branch
      %160 = sbr.rel (0) target = $region37
    $region36: #{tpu_custom_call.1} parent=1 // pred_region
      %161 = dma.done [#allocation5], 128
    $region37: #{tpu_custom_call.1} parent=1 // pred_fallthru
      _
    %162 = vsyncpa [#allocation4], 1
    %163 = vsyncpa [#allocation7], 1
    %164 = vsyncpa [#allocation5], 1

</llo_original>
